<compile_context>
chip_gen: v7x
topology: tpu7x:2x2x1
jax: 0.10.0
libtpu: 0.0.40
codegen_flags: <defaults>
</compile_context>

<pallas_src>
import functools

import jax
import jax.numpy as jnp
from jax.experimental import pallas as pl
from jax.experimental.pallas import tpu as pltpu


def _round_up(n, m):
    return -(-n // m) * m


def _lstm_kernel(x_ref, wih_ref, whh_ref, wlin_ref, out_ref, xg_ref, *, T, B, H):
    """Single-invocation LSTM + last-step Linear.

    x_ref   : (T*B, Kp)  time-major rows; column I is 1.0 (bias), rest zero-pad
    wih_ref : (Kp, 4H)   W_ih^T with fused LSTM bias row; i/f/o cols pre-scaled 0.5
    whh_ref : (H, 4H)    W_hh^T; i/f/o cols pre-scaled 0.5
    wlin_ref: (H+1, O)   W_lin^T with linear bias as last row
    out_ref : (B, O)
    xg_ref  : (T, B, 4H) VMEM scratch holding staged per-step x-gates
    """
    # ---- hoisted input projection: one MXU matmul for all timesteps --------
    xg = jnp.dot(x_ref[...], wih_ref[...], preferred_element_type=jnp.float32)

    # Stage per-step tiles so loop reads are plain aligned vlds (off the
    # serial path; no dependence on the recurrence carry).
    for t in range(T):
        xg_ref[t] = xg[t * B:(t + 1) * B, :]

    whh = whh_ref[...]                                        # (H, 4H)

    # Lane mask selecting the "g" (cell-candidate) gate block; hoisted out of
    # the loop (JAX does not CSE broadcast_in_dim).
    lane = jax.lax.broadcasted_iota(jnp.int32, (B, 4 * H), 1)
    g_mask = (lane >= 2 * H) & (lane < 3 * H)

    h = jnp.zeros((B, H), jnp.float32)
    c = jnp.zeros((B, H), jnp.float32)

    # Fully-unrolled straight-line recurrence (T static & small); h/c stay in
    # vregs, only one small recurrent matmul + one tanh on the serial path.
    for t in range(T):
        gates = xg_ref[t] + jnp.dot(h, whh, preferred_element_type=jnp.float32)
        a = jnp.tanh(gates)                                    # one EUP pass / step
        # i/f/o pre-activations were pre-scaled by 0.5 in the weights, so
        # sigmoid(z) = 0.5 * tanh(z/2) + 0.5 = 0.5*a + 0.5 (one VPU FMA + select).
        act = jnp.where(g_mask, a, 0.5 * a + 0.5)

        i_g = act[:, 0 * H:1 * H]
        f_g = act[:, 1 * H:2 * H]
        g_g = act[:, 2 * H:3 * H]
        o_g = act[:, 3 * H:4 * H]

        c = f_g * c + i_g * g_g
        h = o_g * jnp.tanh(c)

    # Final linear on the last hidden state; bias is the last row of wlin.
    wlin = wlin_ref[...]                                       # (H+1, O)
    out_ref[...] = (jnp.dot(h, wlin[:H, :], preferred_element_type=jnp.float32)
                    + wlin[H:H + 1, :]).astype(out_ref.dtype)


def prepare_lstm_params(params):
    """One-time parameter layout prep. Cache the result; do NOT rerun per call."""
    w_ih, w_hh, b_ih, b_hh, w_lin, b_lin = params
    four_h, I = w_ih.shape
    H = four_h // 4
    O = w_lin.shape[0]

    kp = _round_up(I + 1, 8)          # augmented (x | 1 | 0-pad) contraction dim

    # Pre-scale i/f/o gate columns by 0.5 (sigmoid-via-tanh trick); g stays 1.0.
    col = jnp.arange(4 * H)
    g_cols = (col >= 2 * H) & (col < 3 * H)
    scale = jnp.where(g_cols, 1.0, 0.5).astype(jnp.float32)

    bias = (b_ih + b_hh).reshape(1, 4 * H)
    wih_aug = jnp.concatenate(
        [jnp.transpose(w_ih),                                  # (I, 4H)
         bias,                                                 # fused LSTM bias row
         jnp.zeros((kp - (I + 1), 4 * H), jnp.float32)],       # explicit zero pad
        axis=0) * scale                                        # (Kp, 4H)
    whh_s = jnp.transpose(w_hh) * scale                        # (H, 4H)
    wlin_aug = jnp.concatenate(
        [jnp.transpose(w_lin), b_lin.reshape(1, O)], axis=0)   # (H+1, O)

    return (jnp.asarray(wih_aug, jnp.float32),
            jnp.asarray(whh_s, jnp.float32),
            jnp.asarray(wlin_aug, jnp.float32))


def lstm_model_forward(x, prepared):
    """x: (B, T, I) float32 (batch_first, like PyTorch). Returns (B, O)."""
    wih, whh, wlin = prepared
    B, T, I = x.shape
    kp = wih.shape[0]
    H = whh.shape[0]
    O = wlin.shape[1]

    # Per-call input prep only: time-major rows + ones column (folds LSTM bias
    # into the hoisted matmul) + explicit zero pad to the weight's Kp rows.
    x_tm = jnp.transpose(x, (1, 0, 2)).reshape(T * B, I)
    x_aug = jnp.concatenate(
        [x_tm.astype(jnp.float32),
         jnp.ones((T * B, 1), jnp.float32),
         jnp.zeros((T * B, kp - (I + 1)), jnp.float32)], axis=1)

    kernel = functools.partial(_lstm_kernel, T=T, B=B, H=H)

    # Whole problem (<50 KB) fits VMEM on v5e/v6e/v7x -> single gridless
    # invocation, every operand resident in VMEM for the full kernel.
    # (On v7x with a real batch, add a leading "parallel" batch-tile grid axis
    #  so both TensorCores get independent sequence slices.)
    vmem = lambda: pl.BlockSpec(memory_space=pltpu.MemorySpace.VMEM)
    return pl.pallas_call(
        kernel,
        out_shape=jax.ShapeDtypeStruct((B, O), jnp.float32),
        in_specs=[vmem(), vmem(), vmem(), vmem()],
        out_specs=vmem(),
        scratch_shapes=[pltpu.VMEM((T, B, 4 * H), jnp.float32)],
    )(x_aug, wih, whh, wlin)


def _reference_forward(x, params):
    """Pure-JAX reference of the PyTorch module, for sanity checking."""
    w_ih, w_hh, b_ih, b_hh, w_lin, b_lin = params
    B = x.shape[0]
    H = w_hh.shape[1]
    h = jnp.zeros((B, H), jnp.float32)
    c = jnp.zeros((B, H), jnp.float32)
    for t in range(x.shape[1]):
        g = x[:, t, :] @ w_ih.T + h @ w_hh.T + b_ih + b_hh
        i = jax.nn.sigmoid(g[:, 0 * H:1 * H])
        f = jax.nn.sigmoid(g[:, 1 * H:2 * H])
        gg = jnp.tanh(g[:, 2 * H:3 * H])
        o = jax.nn.sigmoid(g[:, 3 * H:4 * H])
        c = f * c + i * gg
        h = o * jnp.tanh(c)
    return h @ w_lin.T + b_lin


if __name__ == "__main__":
    # Small shapes implied by the module: batch=2, seq=8, input=16, hidden=32, out=8
    B, T, I, H, O = 2, 8, 16, 32, 8

    key = jax.random.PRNGKey(0)
    kx, k1, k2, k3, k4, k5, k6 = jax.random.split(key, 7)

    # Deterministic parameter init (PyTorch-style uniform(-1/sqrt(H), 1/sqrt(H)))
    bound = 1.0 / jnp.sqrt(jnp.float32(H))
    w_ih = jax.random.uniform(k1, (4 * H, I), jnp.float32, -bound, bound)
    w_hh = jax.random.uniform(k2, (4 * H, H), jnp.float32, -bound, bound)
    b_ih = jax.random.uniform(k3, (4 * H,), jnp.float32, -bound, bound)
    b_hh = jax.random.uniform(k4, (4 * H,), jnp.float32, -bound, bound)
    w_lin = jax.random.uniform(k5, (O, H), jnp.float32, -bound, bound)
    b_lin = jax.random.uniform(k6, (O,), jnp.float32, -bound, bound)
    params = (w_ih, w_hh, b_ih, b_hh, w_lin, b_lin)

    x = jax.random.normal(kx, (B, T, I), jnp.float32)

    # One-time parameter layout prep (cached outside the forward path).
    prepared = prepare_lstm_params(params)

    fwd = jax.jit(lstm_model_forward)
    out = fwd(x, prepared)
    out = jax.block_until_ready(out)

    ref = _reference_forward(x, params)
    assert out.shape == (B, O)
    # Slightly looser tolerance than before: sigmoid is now computed via tanh.
    assert jnp.allclose(out, ref, atol=5e-5, rtol=5e-5), "mismatch vs reference"

    print("KERNEL_OK")
</pallas_src>

<mosaic_0001>
module attributes {stable_mosaic.version = 11 : i64} {
  func.func @_lstm_kernel(%arg0: memref<16x24xf32, #tpu.memory_space<vmem>>, %arg1: memref<24x128xf32, #tpu.memory_space<vmem>>, %arg2: memref<32x128xf32, #tpu.memory_space<vmem>>, %arg3: memref<33x8xf32, #tpu.memory_space<vmem>>, %arg4: memref<2x8xf32, #tpu.memory_space<vmem>>, %arg5: memref<8x2x128xf32, #tpu.memory_space<vmem>>) attributes {dimension_semantics = [], scalar_prefetch = 0 : i64, scratch_operands = 1 : i64, tpu.core_type = #tpu.core_type<tc>} {
    %c0 = arith.constant 0 : index
    %c0_0 = arith.constant 0 : index
    %0 = vector.load %arg0[%c0, %c0_0] : memref<16x24xf32, #tpu.memory_space<vmem>>, vector<16x24xf32>
    %c0_1 = arith.constant 0 : index
    %c0_2 = arith.constant 0 : index
    %1 = vector.load %arg1[%c0_1, %c0_2] : memref<24x128xf32, #tpu.memory_space<vmem>>, vector<24x128xf32>
    %cst = arith.constant dense<0.000000e+00> : vector<16x128xf32>
    %2 = tpu.matmul %0, %1, %cst {dimension_numbers = #tpu.dot_dimension_numbers<[1], [0], [0], [1], [0, 0, 1, 1], [], []>} : vector<16x24xf32>, vector<24x128xf32>, vector<16x128xf32> -> vector<16x128xf32>
    %3 = vector.extract_strided_slice %2 {offsets = [0, 0], sizes = [2, 128], strides = [1, 1]} : vector<16x128xf32> to vector<2x128xf32>
    %c0_3 = arith.constant 0 : index
    %c0_4 = arith.constant 0 : index
    %c0_5 = arith.constant 0 : index
    %4 = vector.load %arg5[%c0_3, %c0_4, %c0_5] : memref<8x2x128xf32, #tpu.memory_space<vmem>>, vector<1x2x128xf32>
    %5 = vector.shape_cast %4 : vector<1x2x128xf32> to vector<2x128xf32>
    %6 = vector.shape_cast %3 : vector<2x128xf32> to vector<1x2x128xf32>
    tpu.vector_store %arg5[%c0_3, %c0_4, %c0_5], %6 {strides = array<i32>} : memref<8x2x128xf32, #tpu.memory_space<vmem>>, vector<1x2x128xf32>,
    %7 = vector.extract_strided_slice %2 {offsets = [2, 0], sizes = [2, 128], strides = [1, 1]} : vector<16x128xf32> to vector<2x128xf32>
    %c1 = arith.constant 1 : index
    %c0_6 = arith.constant 0 : index
    %c0_7 = arith.constant 0 : index
    %8 = vector.load %arg5[%c1, %c0_6, %c0_7] : memref<8x2x128xf32, #tpu.memory_space<vmem>>, vector<1x2x128xf32>
    %9 = vector.shape_cast %8 : vector<1x2x128xf32> to vector<2x128xf32>
    %10 = vector.shape_cast %7 : vector<2x128xf32> to vector<1x2x128xf32>
    tpu.vector_store %arg5[%c1, %c0_6, %c0_7], %10 {strides = array<i32>} : memref<8x2x128xf32, #tpu.memory_space<vmem>>, vector<1x2x128xf32>,
    %11 = vector.extract_strided_slice %2 {offsets = [4, 0], sizes = [2, 128], strides = [1, 1]} : vector<16x128xf32> to vector<2x128xf32>
    %c2 = arith.constant 2 : index
    %c0_8 = arith.constant 0 : index
    %c0_9 = arith.constant 0 : index
    %12 = vector.load %arg5[%c2, %c0_8, %c0_9] : memref<8x2x128xf32, #tpu.memory_space<vmem>>, vector<1x2x128xf32>
    %13 = vector.shape_cast %12 : vector<1x2x128xf32> to vector<2x128xf32>
    %14 = vector.shape_cast %11 : vector<2x128xf32> to vector<1x2x128xf32>
    tpu.vector_store %arg5[%c2, %c0_8, %c0_9], %14 {strides = array<i32>} : memref<8x2x128xf32, #tpu.memory_space<vmem>>, vector<1x2x128xf32>,
    %15 = vector.extract_strided_slice %2 {offsets = [6, 0], sizes = [2, 128], strides = [1, 1]} : vector<16x128xf32> to vector<2x128xf32>
    %c3 = arith.constant 3 : index
    %c0_10 = arith.constant 0 : index
    %c0_11 = arith.constant 0 : index
    %16 = vector.load %arg5[%c3, %c0_10, %c0_11] : memref<8x2x128xf32, #tpu.memory_space<vmem>>, vector<1x2x128xf32>
    %17 = vector.shape_cast %16 : vector<1x2x128xf32> to vector<2x128xf32>
    %18 = vector.shape_cast %15 : vector<2x128xf32> to vector<1x2x128xf32>
    tpu.vector_store %arg5[%c3, %c0_10, %c0_11], %18 {strides = array<i32>} : memref<8x2x128xf32, #tpu.memory_space<vmem>>, vector<1x2x128xf32>,
    %19 = vector.extract_strided_slice %2 {offsets = [8, 0], sizes = [2, 128], strides = [1, 1]} : vector<16x128xf32> to vector<2x128xf32>
    %c4 = arith.constant 4 : index
    %c0_12 = arith.constant 0 : index
    %c0_13 = arith.constant 0 : index
    %20 = vector.load %arg5[%c4, %c0_12, %c0_13] : memref<8x2x128xf32, #tpu.memory_space<vmem>>, vector<1x2x128xf32>
    %21 = vector.shape_cast %20 : vector<1x2x128xf32> to vector<2x128xf32>
    %22 = vector.shape_cast %19 : vector<2x128xf32> to vector<1x2x128xf32>
    tpu.vector_store %arg5[%c4, %c0_12, %c0_13], %22 {strides = array<i32>} : memref<8x2x128xf32, #tpu.memory_space<vmem>>, vector<1x2x128xf32>,
    %23 = vector.extract_strided_slice %2 {offsets = [10, 0], sizes = [2, 128], strides = [1, 1]} : vector<16x128xf32> to vector<2x128xf32>
    %c5 = arith.constant 5 : index
    %c0_14 = arith.constant 0 : index
    %c0_15 = arith.constant 0 : index
    %24 = vector.load %arg5[%c5, %c0_14, %c0_15] : memref<8x2x128xf32, #tpu.memory_space<vmem>>, vector<1x2x128xf32>
    %25 = vector.shape_cast %24 : vector<1x2x128xf32> to vector<2x128xf32>
    %26 = vector.shape_cast %23 : vector<2x128xf32> to vector<1x2x128xf32>
    tpu.vector_store %arg5[%c5, %c0_14, %c0_15], %26 {strides = array<i32>} : memref<8x2x128xf32, #tpu.memory_space<vmem>>, vector<1x2x128xf32>,
    %27 = vector.extract_strided_slice %2 {offsets = [12, 0], sizes = [2, 128], strides = [1, 1]} : vector<16x128xf32> to vector<2x128xf32>
    %c6 = arith.constant 6 : index
    %c0_16 = arith.constant 0 : index
    %c0_17 = arith.constant 0 : index
    %28 = vector.load %arg5[%c6, %c0_16, %c0_17] : memref<8x2x128xf32, #tpu.memory_space<vmem>>, vector<1x2x128xf32>
    %29 = vector.shape_cast %28 : vector<1x2x128xf32> to vector<2x128xf32>
    %30 = vector.shape_cast %27 : vector<2x128xf32> to vector<1x2x128xf32>
    tpu.vector_store %arg5[%c6, %c0_16, %c0_17], %30 {strides = array<i32>} : memref<8x2x128xf32, #tpu.memory_space<vmem>>, vector<1x2x128xf32>,
    %31 = vector.extract_strided_slice %2 {offsets = [14, 0], sizes = [2, 128], strides = [1, 1]} : vector<16x128xf32> to vector<2x128xf32>
    %c7 = arith.constant 7 : index
    %c0_18 = arith.constant 0 : index
    %c0_19 = arith.constant 0 : index
    %32 = vector.load %arg5[%c7, %c0_18, %c0_19] : memref<8x2x128xf32, #tpu.memory_space<vmem>>, vector<1x2x128xf32>
    %33 = vector.shape_cast %32 : vector<1x2x128xf32> to vector<2x128xf32>
    %34 = vector.shape_cast %31 : vector<2x128xf32> to vector<1x2x128xf32>
    tpu.vector_store %arg5[%c7, %c0_18, %c0_19], %34 {strides = array<i32>} : memref<8x2x128xf32, #tpu.memory_space<vmem>>, vector<1x2x128xf32>,
    %c0_20 = arith.constant 0 : index
    %c0_21 = arith.constant 0 : index
    %35 = vector.load %arg2[%c0_20, %c0_21] : memref<32x128xf32, #tpu.memory_space<vmem>>, vector<32x128xf32>
    %36 = tpu.iota {dimensions = array<i32: 1>} : vector<2x128xi32>
    %c64_i32 = arith.constant 64 : i32
    %37 = vector.broadcast %c64_i32 : i32 to vector<2x128xi32>
    %38 = arith.cmpi sge, %36, %37 : vector<2x128xi32>
    %c96_i32 = arith.constant 96 : i32
    %39 = vector.broadcast %c96_i32 : i32 to vector<2x128xi32>
    %40 = arith.cmpi slt, %36, %39 : vector<2x128xi32>
    %41 = arith.andi %38, %40 : vector<2x128xi1>
    %cst_22 = arith.constant 0.000000e+00 : f32
    %42 = vector.broadcast %cst_22 : f32 to vector<2x32xf32>
    %cst_23 = arith.constant 0.000000e+00 : f32
    %43 = vector.broadcast %cst_23 : f32 to vector<2x32xf32>
    %c0_24 = arith.constant 0 : index
    %c0_25 = arith.constant 0 : index
    %c0_26 = arith.constant 0 : index
    %44 = vector.load %arg5[%c0_24, %c0_25, %c0_26] : memref<8x2x128xf32, #tpu.memory_space<vmem>>, vector<1x2x128xf32>
    %45 = vector.shape_cast %44 : vector<1x2x128xf32> to vector<2x128xf32>
    %cst_27 = arith.constant dense<0.000000e+00> : vector<2x128xf32>
    %46 = tpu.matmul %42, %35, %cst_27 {dimension_numbers = #tpu.dot_dimension_numbers<[1], [0], [0], [1], [0, 0, 1, 1], [], []>} : vector<2x32xf32>, vector<32x128xf32>, vector<2x128xf32> -> vector<2x128xf32>
    %47 = arith.addf %45, %46 : vector<2x128xf32>
    %48 = math.tanh %47 : vector<2x128xf32>
    %cst_28 = arith.constant 5.000000e-01 : f32
    %49 = vector.broadcast %cst_28 : f32 to vector<2x128xf32>
    %50 = arith.mulf %49, %48 : vector<2x128xf32>
    %cst_29 = arith.constant 5.000000e-01 : f32
    %51 = vector.broadcast %cst_29 : f32 to vector<2x128xf32>
    %52 = arith.addf %50, %51 : vector<2x128xf32>
    %53 = arith.select %41, %48, %52 : vector<2x128xi1>, vector<2x128xf32>
    %54 = vector.extract_strided_slice %53 {offsets = [0, 0], sizes = [2, 32], strides = [1, 1]} : vector<2x128xf32> to vector<2x32xf32>
    %55 = vector.extract_strided_slice %53 {offsets = [0, 32], sizes = [2, 32], strides = [1, 1]} : vector<2x128xf32> to vector<2x32xf32>
    %56 = vector.extract_strided_slice %53 {offsets = [0, 64], sizes = [2, 32], strides = [1, 1]} : vector<2x128xf32> to vector<2x32xf32>
    %57 = vector.extract_strided_slice %53 {offsets = [0, 96], sizes = [2, 32], strides = [1, 1]} : vector<2x128xf32> to vector<2x32xf32>
    %58 = arith.mulf %55, %43 : vector<2x32xf32>
    %59 = arith.mulf %54, %56 : vector<2x32xf32>
    %60 = arith.addf %58, %59 : vector<2x32xf32>
    %61 = math.tanh %60 : vector<2x32xf32>
    %62 = arith.mulf %57, %61 : vector<2x32xf32>
    %c1_30 = arith.constant 1 : index
    %c0_31 = arith.constant 0 : index
    %c0_32 = arith.constant 0 : index
    %63 = vector.load %arg5[%c1_30, %c0_31, %c0_32] : memref<8x2x128xf32, #tpu.memory_space<vmem>>, vector<1x2x128xf32>
    %64 = vector.shape_cast %63 : vector<1x2x128xf32> to vector<2x128xf32>
    %cst_33 = arith.constant dense<0.000000e+00> : vector<2x128xf32>
    %65 = tpu.matmul %62, %35, %cst_33 {dimension_numbers = #tpu.dot_dimension_numbers<[1], [0], [0], [1], [0, 0, 1, 1], [], []>} : vector<2x32xf32>, vector<32x128xf32>, vector<2x128xf32> -> vector<2x128xf32>
    %66 = arith.addf %64, %65 : vector<2x128xf32>
    %67 = math.tanh %66 : vector<2x128xf32>
    %cst_34 = arith.constant 5.000000e-01 : f32
    %68 = vector.broadcast %cst_34 : f32 to vector<2x128xf32>
    %69 = arith.mulf %68, %67 : vector<2x128xf32>
    %cst_35 = arith.constant 5.000000e-01 : f32
    %70 = vector.broadcast %cst_35 : f32 to vector<2x128xf32>
    %71 = arith.addf %69, %70 : vector<2x128xf32>
    %72 = arith.select %41, %67, %71 : vector<2x128xi1>, vector<2x128xf32>
    %73 = vector.extract_strided_slice %72 {offsets = [0, 0], sizes = [2, 32], strides = [1, 1]} : vector<2x128xf32> to vector<2x32xf32>
    %74 = vector.extract_strided_slice %72 {offsets = [0, 32], sizes = [2, 32], strides = [1, 1]} : vector<2x128xf32> to vector<2x32xf32>
    %75 = vector.extract_strided_slice %72 {offsets = [0, 64], sizes = [2, 32], strides = [1, 1]} : vector<2x128xf32> to vector<2x32xf32>
    %76 = vector.extract_strided_slice %72 {offsets = [0, 96], sizes = [2, 32], strides = [1, 1]} : vector<2x128xf32> to vector<2x32xf32>
    %77 = arith.mulf %74, %60 : vector<2x32xf32>
    %78 = arith.mulf %73, %75 : vector<2x32xf32>
    %79 = arith.addf %77, %78 : vector<2x32xf32>
    %80 = math.tanh %79 : vector<2x32xf32>
    %81 = arith.mulf %76, %80 : vector<2x32xf32>
    %c2_36 = arith.constant 2 : index
    %c0_37 = arith.constant 0 : index
    %c0_38 = arith.constant 0 : index
    %82 = vector.load %arg5[%c2_36, %c0_37, %c0_38] : memref<8x2x128xf32, #tpu.memory_space<vmem>>, vector<1x2x128xf32>
    %83 = vector.shape_cast %82 : vector<1x2x128xf32> to vector<2x128xf32>
    %cst_39 = arith.constant dense<0.000000e+00> : vector<2x128xf32>
    %84 = tpu.matmul %81, %35, %cst_39 {dimension_numbers = #tpu.dot_dimension_numbers<[1], [0], [0], [1], [0, 0, 1, 1], [], []>} : vector<2x32xf32>, vector<32x128xf32>, vector<2x128xf32> -> vector<2x128xf32>
    %85 = arith.addf %83, %84 : vector<2x128xf32>
    %86 = math.tanh %85 : vector<2x128xf32>
    %cst_40 = arith.constant 5.000000e-01 : f32
    %87 = vector.broadcast %cst_40 : f32 to vector<2x128xf32>
    %88 = arith.mulf %87, %86 : vector<2x128xf32>
    %cst_41 = arith.constant 5.000000e-01 : f32
    %89 = vector.broadcast %cst_41 : f32 to vector<2x128xf32>
    %90 = arith.addf %88, %89 : vector<2x128xf32>
    %91 = arith.select %41, %86, %90 : vector<2x128xi1>, vector<2x128xf32>
    %92 = vector.extract_strided_slice %91 {offsets = [0, 0], sizes = [2, 32], strides = [1, 1]} : vector<2x128xf32> to vector<2x32xf32>
    %93 = vector.extract_strided_slice %91 {offsets = [0, 32], sizes = [2, 32], strides = [1, 1]} : vector<2x128xf32> to vector<2x32xf32>
    %94 = vector.extract_strided_slice %91 {offsets = [0, 64], sizes = [2, 32], strides = [1, 1]} : vector<2x128xf32> to vector<2x32xf32>
    %95 = vector.extract_strided_slice %91 {offsets = [0, 96], sizes = [2, 32], strides = [1, 1]} : vector<2x128xf32> to vector<2x32xf32>
    %96 = arith.mulf %93, %79 : vector<2x32xf32>
    %97 = arith.mulf %92, %94 : vector<2x32xf32>
    %98 = arith.addf %96, %97 : vector<2x32xf32>
    %99 = math.tanh %98 : vector<2x32xf32>
    %100 = arith.mulf %95, %99 : vector<2x32xf32>
    %c3_42 = arith.constant 3 : index
    %c0_43 = arith.constant 0 : index
    %c0_44 = arith.constant 0 : index
    %101 = vector.load %arg5[%c3_42, %c0_43, %c0_44] : memref<8x2x128xf32, #tpu.memory_space<vmem>>, vector<1x2x128xf32>
    %102 = vector.shape_cast %101 : vector<1x2x128xf32> to vector<2x128xf32>
    %cst_45 = arith.constant dense<0.000000e+00> : vector<2x128xf32>
    %103 = tpu.matmul %100, %35, %cst_45 {dimension_numbers = #tpu.dot_dimension_numbers<[1], [0], [0], [1], [0, 0, 1, 1], [], []>} : vector<2x32xf32>, vector<32x128xf32>, vector<2x128xf32> -> vector<2x128xf32>
    %104 = arith.addf %102, %103 : vector<2x128xf32>
    %105 = math.tanh %104 : vector<2x128xf32>
    %cst_46 = arith.constant 5.000000e-01 : f32
    %106 = vector.broadcast %cst_46 : f32 to vector<2x128xf32>
    %107 = arith.mulf %106, %105 : vector<2x128xf32>
    %cst_47 = arith.constant 5.000000e-01 : f32
    %108 = vector.broadcast %cst_47 : f32 to vector<2x128xf32>
    %109 = arith.addf %107, %108 : vector<2x128xf32>
    %110 = arith.select %41, %105, %109 : vector<2x128xi1>, vector<2x128xf32>
    %111 = vector.extract_strided_slice %110 {offsets = [0, 0], sizes = [2, 32], strides = [1, 1]} : vector<2x128xf32> to vector<2x32xf32>
    %112 = vector.extract_strided_slice %110 {offsets = [0, 32], sizes = [2, 32], strides = [1, 1]} : vector<2x128xf32> to vector<2x32xf32>
    %113 = vector.extract_strided_slice %110 {offsets = [0, 64], sizes = [2, 32], strides = [1, 1]} : vector<2x128xf32> to vector<2x32xf32>
    %114 = vector.extract_strided_slice %110 {offsets = [0, 96], sizes = [2, 32], strides = [1, 1]} : vector<2x128xf32> to vector<2x32xf32>
    %115 = arith.mulf %112, %98 : vector<2x32xf32>
    %116 = arith.mulf %111, %113 : vector<2x32xf32>
    %117 = arith.addf %115, %116 : vector<2x32xf32>
    %118 = math.tanh %117 : vector<2x32xf32>
    %119 = arith.mulf %114, %118 : vector<2x32xf32>
    %c4_48 = arith.constant 4 : index
    %c0_49 = arith.constant 0 : index
    %c0_50 = arith.constant 0 : index
    %120 = vector.load %arg5[%c4_48, %c0_49, %c0_50] : memref<8x2x128xf32, #tpu.memory_space<vmem>>, vector<1x2x128xf32>
    %121 = vector.shape_cast %120 : vector<1x2x128xf32> to vector<2x128xf32>
    %cst_51 = arith.constant dense<0.000000e+00> : vector<2x128xf32>
    %122 = tpu.matmul %119, %35, %cst_51 {dimension_numbers = #tpu.dot_dimension_numbers<[1], [0], [0], [1], [0, 0, 1, 1], [], []>} : vector<2x32xf32>, vector<32x128xf32>, vector<2x128xf32> -> vector<2x128xf32>
    %123 = arith.addf %121, %122 : vector<2x128xf32>
    %124 = math.tanh %123 : vector<2x128xf32>
    %cst_52 = arith.constant 5.000000e-01 : f32
    %125 = vector.broadcast %cst_52 : f32 to vector<2x128xf32>
    %126 = arith.mulf %125, %124 : vector<2x128xf32>
    %cst_53 = arith.constant 5.000000e-01 : f32
    %127 = vector.broadcast %cst_53 : f32 to vector<2x128xf32>
    %128 = arith.addf %126, %127 : vector<2x128xf32>
    %129 = arith.select %41, %124, %128 : vector<2x128xi1>, vector<2x128xf32>
    %130 = vector.extract_strided_slice %129 {offsets = [0, 0], sizes = [2, 32], strides = [1, 1]} : vector<2x128xf32> to vector<2x32xf32>
    %131 = vector.extract_strided_slice %129 {offsets = [0, 32], sizes = [2, 32], strides = [1, 1]} : vector<2x128xf32> to vector<2x32xf32>
    %132 = vector.extract_strided_slice %129 {offsets = [0, 64], sizes = [2, 32], strides = [1, 1]} : vector<2x128xf32> to vector<2x32xf32>
    %133 = vector.extract_strided_slice %129 {offsets = [0, 96], sizes = [2, 32], strides = [1, 1]} : vector<2x128xf32> to vector<2x32xf32>
    %134 = arith.mulf %131, %117 : vector<2x32xf32>
    %135 = arith.mulf %130, %132 : vector<2x32xf32>
    %136 = arith.addf %134, %135 : vector<2x32xf32>
    %137 = math.tanh %136 : vector<2x32xf32>
    %138 = arith.mulf %133, %137 : vector<2x32xf32>
    %c5_54 = arith.constant 5 : index
    %c0_55 = arith.constant 0 : index
    %c0_56 = arith.constant 0 : index
    %139 = vector.load %arg5[%c5_54, %c0_55, %c0_56] : memref<8x2x128xf32, #tpu.memory_space<vmem>>, vector<1x2x128xf32>
    %140 = vector.shape_cast %139 : vector<1x2x128xf32> to vector<2x128xf32>
    %cst_57 = arith.constant dense<0.000000e+00> : vector<2x128xf32>
    %141 = tpu.matmul %138, %35, %cst_57 {dimension_numbers = #tpu.dot_dimension_numbers<[1], [0], [0], [1], [0, 0, 1, 1], [], []>} : vector<2x32xf32>, vector<32x128xf32>, vector<2x128xf32> -> vector<2x128xf32>
    %142 = arith.addf %140, %141 : vector<2x128xf32>
    %143 = math.tanh %142 : vector<2x128xf32>
    %cst_58 = arith.constant 5.000000e-01 : f32
    %144 = vector.broadcast %cst_58 : f32 to vector<2x128xf32>
    %145 = arith.mulf %144, %143 : vector<2x128xf32>
    %cst_59 = arith.constant 5.000000e-01 : f32
    %146 = vector.broadcast %cst_59 : f32 to vector<2x128xf32>
    %147 = arith.addf %145, %146 : vector<2x128xf32>
    %148 = arith.select %41, %143, %147 : vector<2x128xi1>, vector<2x128xf32>
    %149 = vector.extract_strided_slice %148 {offsets = [0, 0], sizes = [2, 32], strides = [1, 1]} : vector<2x128xf32> to vector<2x32xf32>
    %150 = vector.extract_strided_slice %148 {offsets = [0, 32], sizes = [2, 32], strides = [1, 1]} : vector<2x128xf32> to vector<2x32xf32>
    %151 = vector.extract_strided_slice %148 {offsets = [0, 64], sizes = [2, 32], strides = [1, 1]} : vector<2x128xf32> to vector<2x32xf32>
    %152 = vector.extract_strided_slice %148 {offsets = [0, 96], sizes = [2, 32], strides = [1, 1]} : vector<2x128xf32> to vector<2x32xf32>
    %153 = arith.mulf %150, %136 : vector<2x32xf32>
    %154 = arith.mulf %149, %151 : vector<2x32xf32>
    %155 = arith.addf %153, %154 : vector<2x32xf32>
    %156 = math.tanh %155 : vector<2x32xf32>
    %157 = arith.mulf %152, %156 : vector<2x32xf32>
    %c6_60 = arith.constant 6 : index
    %c0_61 = arith.constant 0 : index
    %c0_62 = arith.constant 0 : index
    %158 = vector.load %arg5[%c6_60, %c0_61, %c0_62] : memref<8x2x128xf32, #tpu.memory_space<vmem>>, vector<1x2x128xf32>
    %159 = vector.shape_cast %158 : vector<1x2x128xf32> to vector<2x128xf32>
    %cst_63 = arith.constant dense<0.000000e+00> : vector<2x128xf32>
    %160 = tpu.matmul %157, %35, %cst_63 {dimension_numbers = #tpu.dot_dimension_numbers<[1], [0], [0], [1], [0, 0, 1, 1], [], []>} : vector<2x32xf32>, vector<32x128xf32>, vector<2x128xf32> -> vector<2x128xf32>
    %161 = arith.addf %159, %160 : vector<2x128xf32>
    %162 = math.tanh %161 : vector<2x128xf32>
    %cst_64 = arith.constant 5.000000e-01 : f32
    %163 = vector.broadcast %cst_64 : f32 to vector<2x128xf32>
    %164 = arith.mulf %163, %162 : vector<2x128xf32>
    %cst_65 = arith.constant 5.000000e-01 : f32
    %165 = vector.broadcast %cst_65 : f32 to vector<2x128xf32>
    %166 = arith.addf %164, %165 : vector<2x128xf32>
    %167 = arith.select %41, %162, %166 : vector<2x128xi1>, vector<2x128xf32>
    %168 = vector.extract_strided_slice %167 {offsets = [0, 0], sizes = [2, 32], strides = [1, 1]} : vector<2x128xf32> to vector<2x32xf32>
    %169 = vector.extract_strided_slice %167 {offsets = [0, 32], sizes = [2, 32], strides = [1, 1]} : vector<2x128xf32> to vector<2x32xf32>
    %170 = vector.extract_strided_slice %167 {offsets = [0, 64], sizes = [2, 32], strides = [1, 1]} : vector<2x128xf32> to vector<2x32xf32>
    %171 = vector.extract_strided_slice %167 {offsets = [0, 96], sizes = [2, 32], strides = [1, 1]} : vector<2x128xf32> to vector<2x32xf32>
    %172 = arith.mulf %169, %155 : vector<2x32xf32>
    %173 = arith.mulf %168, %170 : vector<2x32xf32>
    %174 = arith.addf %172, %173 : vector<2x32xf32>
    %175 = math.tanh %174 : vector<2x32xf32>
    %176 = arith.mulf %171, %175 : vector<2x32xf32>
    %c7_66 = arith.constant 7 : index
    %c0_67 = arith.constant 0 : index
    %c0_68 = arith.constant 0 : index
    %177 = vector.load %arg5[%c7_66, %c0_67, %c0_68] : memref<8x2x128xf32, #tpu.memory_space<vmem>>, vector<1x2x128xf32>
    %178 = vector.shape_cast %177 : vector<1x2x128xf32> to vector<2x128xf32>
    %cst_69 = arith.constant dense<0.000000e+00> : vector<2x128xf32>
    %179 = tpu.matmul %176, %35, %cst_69 {dimension_numbers = #tpu.dot_dimension_numbers<[1], [0], [0], [1], [0, 0, 1, 1], [], []>} : vector<2x32xf32>, vector<32x128xf32>, vector<2x128xf32> -> vector<2x128xf32>
    %180 = arith.addf %178, %179 : vector<2x128xf32>
    %181 = math.tanh %180 : vector<2x128xf32>
    %cst_70 = arith.constant 5.000000e-01 : f32
    %182 = vector.broadcast %cst_70 : f32 to vector<2x128xf32>
    %183 = arith.mulf %182, %181 : vector<2x128xf32>
    %cst_71 = arith.constant 5.000000e-01 : f32
    %184 = vector.broadcast %cst_71 : f32 to vector<2x128xf32>
    %185 = arith.addf %183, %184 : vector<2x128xf32>
    %186 = arith.select %41, %181, %185 : vector<2x128xi1>, vector<2x128xf32>
    %187 = vector.extract_strided_slice %186 {offsets = [0, 0], sizes = [2, 32], strides = [1, 1]} : vector<2x128xf32> to vector<2x32xf32>
    %188 = vector.extract_strided_slice %186 {offsets = [0, 32], sizes = [2, 32], strides = [1, 1]} : vector<2x128xf32> to vector<2x32xf32>
    %189 = vector.extract_strided_slice %186 {offsets = [0, 64], sizes = [2, 32], strides = [1, 1]} : vector<2x128xf32> to vector<2x32xf32>
    %190 = vector.extract_strided_slice %186 {offsets = [0, 96], sizes = [2, 32], strides = [1, 1]} : vector<2x128xf32> to vector<2x32xf32>
    %191 = arith.mulf %188, %174 : vector<2x32xf32>
    %192 = arith.mulf %187, %189 : vector<2x32xf32>
    %193 = arith.addf %191, %192 : vector<2x32xf32>
    %194 = math.tanh %193 : vector<2x32xf32>
    %195 = arith.mulf %190, %194 : vector<2x32xf32>
    %c0_72 = arith.constant 0 : index
    %c0_73 = arith.constant 0 : index
    %196 = vector.load %arg3[%c0_72, %c0_73] : memref<33x8xf32, #tpu.memory_space<vmem>>, vector<33x8xf32>
    %197 = vector.extract_strided_slice %196 {offsets = [0, 0], sizes = [32, 8], strides = [1, 1]} : vector<33x8xf32> to vector<32x8xf32>
    %cst_74 = arith.constant dense<0.000000e+00> : vector<2x8xf32>
    %198 = tpu.matmul %195, %197, %cst_74 {dimension_numbers = #tpu.dot_dimension_numbers<[1], [0], [0], [1], [0, 0, 1, 1], [], []>} : vector<2x32xf32>, vector<32x8xf32>, vector<2x8xf32> -> vector<2x8xf32>
    %199 = vector.extract_strided_slice %196 {offsets = [32, 0], sizes = [1, 8], strides = [1, 1]} : vector<33x8xf32> to vector<1x8xf32>
    %200 = vector.broadcast %199 : vector<1x8xf32> to vector<2x8xf32>
    %201 = arith.addf %198, %200 : vector<2x8xf32>
    %c0_75 = arith.constant 0 : index
    %c0_76 = arith.constant 0 : index
    %202 = vector.load %arg4[%c0_75, %c0_76] : memref<2x8xf32, #tpu.memory_space<vmem>>, vector<2x8xf32>
    tpu.vector_store %arg4[%c0_75, %c0_76], %201 {strides = array<i32>} : memref<2x8xf32, #tpu.memory_space<vmem>>, vector<2x8xf32>,
    return
  }
}

</mosaic_0001>

<llo_original>
// kernel: lstm_model_forward.1
$region0: #{lstm_model_forward.1}
  #allocation0 [shape = 'u32[]', space=smem, size = 0x4, offset = 0x4, fixed_abs, tag = 'smem constant byte address 0x4 - core index']
  #allocation1 [shape = 'u32[144,128]{1,0:T(1,128)}', space=vmem, size = 0x12000, scoped, tag = 'internal scratch']
  #allocation2 [shape = 'f32[8,2,128]{2,1,0:T(2,128)}', space=vmem, size = 0x2000, scoped, tag = 'scratch operand']
  %s0 = inlined_call_operand.vmem [shape: f32[16,24], index: 0, kind: input, shape index: {}]
  %s1 = inlined_call_operand.vmem [shape: f32[24,128], index: 1, kind: input, shape index: {}]
  %s2 = inlined_call_operand.vmem [shape: f32[32,128], index: 2, kind: input, shape index: {}]
  %s3 = inlined_call_operand.vmem [shape: f32[33,8], index: 3, kind: input, shape index: {}]
  %s4 = inlined_call_operand.hbm [shape: f32[2,8], index: 4, kind: output, shape index: {}]
  %s5 = sld [smem:[#allocation0]]
  $region26: #{lstm_model_forward.1} parent=0
    _
  %s7 = ssub.s32 1, %s5
  %s8 = scalar_select 0, %s7, %s5
  $region1: #{lstm_model_forward.1} parent=0
    #allocation3 [shape = 'u8[1024]{0}', space=vmem, size = 0x400, scoped, tag = 'output window, operand 0, single buffered']
    #allocation4 [shape = 's32[1]{0}', space=sflag, size = 0x4, scoped, tag = 'scoped memory for lstm_model_forward.1']
    %9 = vsyncpa [#allocation4], 0
    // Predicated region
    $region2: #{lstm_model_forward.1} parent=1 // pred_check
      _
    $region3: #{lstm_model_forward.1} parent=1 // pred_check_branch
      %11 = sbr.rel (0) target = $region5
    $region4: #{lstm_model_forward.1} parent=1 // pred_region
      _
    $region5: #{lstm_model_forward.1} parent=1 // pred_fallthru
      _
    // Predicated region
    $region6: #{lstm_model_forward.1} parent=1 // pred_check
      _
    $region7: #{lstm_model_forward.1} parent=1 // pred_check_branch
      %13 = sbr.rel (0) target = $region9
    $region8: #{lstm_model_forward.1} parent=1 // pred_region
      _
    $region9: #{lstm_model_forward.1} parent=1 // pred_fallthru
      _
    // Predicated region
    $region10: #{lstm_model_forward.1} parent=1 // pred_check
      _
    $region11: #{lstm_model_forward.1} parent=1 // pred_check_branch
      %15 = sbr.rel (0) target = $region13
    $region12: #{lstm_model_forward.1} parent=1 // pred_region
      _
    $region13: #{lstm_model_forward.1} parent=1 // pred_fallthru
      _
    // Predicated region
    $region14: #{lstm_model_forward.1} parent=1 // pred_check
      _
    $region15: #{lstm_model_forward.1} parent=1 // pred_check_branch
      %17 = sbr.rel (0) target = $region17
    $region16: #{lstm_model_forward.1} parent=1 // pred_region
      _
    $region17: #{lstm_model_forward.1} parent=1 // pred_fallthru
      _
    %v18 = vld [vmem:[%s0] sm:$0xff]
    %v19 = vld [vmem:[%s0 + $0x8] sm:$0xff]
    %v20 = vld [vmem:[%s1] sm:$0xff]
    %v21 = vld [vmem:[%s1 + $0x8] sm:$0xff]
    %v22 = vld [vmem:[%s1 + $0x10] sm:$0xff]
    %vm23 = vcmask 195584
    %v25 = vsel %vm23, %v18, 0
    %v28 = vsel %vm23, %v19, 0
    %30 = vmatprep.subr.mxu0 0.0
    %31 = vmatpush1.msra.mxu0 %v20
    %32 = vmatprep.subr.mxu0 0.0
    %33 = vmatpush1.msra.mxu0 %v21
    %34 = vmatprep.subr.mxu0 0.0
    %35 = vmatpush1.msra.mxu0 %v22
    %36 = vmatprep.subr.mxu0 0.0
    %37 = vmatpush1.msra.mxu0 0.0
    %38 = vmatprep.subr.mxu0 0.0
    %39 = vmatpush1.msra.mxu0 0.0
    %40 = vmatprep.subr.mxu0 0.0
    %41 = vmatpush1.msra.mxu0 0.0
    %42 = vmatprep.subr.mxu0 0.0
    %43 = vmatpush1.msra.mxu0 0.0
    %44 = vmatprep.subr.mxu0 0.0
    %45 = vmatpush1.msra.mxu0 0.0
    %46 = vmatprep.subr.mxu0 0.0
    %47 = vmatpush1.msra.mxu0 0.0
    %48 = vmatprep.subr.mxu0 0.0
    %49 = vmatpush1.msra.mxu0 0.0
    %50 = vmatprep.subr.mxu0 0.0
    %51 = vmatpush1.msra.mxu0 0.0
    %52 = vmatprep.subr.mxu0 0.0
    %53 = vmatpush1.msra.mxu0 0.0
    %54 = vmatprep.subr.mxu0 0.0
    %55 = vmatpush1.msra.mxu0 0.0
    %56 = vmatprep.subr.mxu0 0.0
    %57 = vmatpush1.msra.mxu0 0.0
    %58 = vmatprep.subr.mxu0 0.0
    %59 = vmatpush1.msra.mxu0 0.0
    %60 = vmatprep.subr.mxu0 0.0
    %61 = vmatpush1.msra.mxu0 0.0
    %62 = vmatprep.subr.mxu0 0.0
    %63 = vmatpush1.msra.mxu0 0.0
    %64 = vmatprep.subr.mxu0 0.0
    %65 = vmatpush1.msra.mxu0 0.0
    %66 = vmatprep.subr.mxu0 0.0
    %67 = vmatpush1.msra.mxu0 0.0
    %68 = vmatprep.subr.mxu0 0.0
    %69 = vmatpush1.msra.mxu0 0.0
    %70 = vmatprep.subr.mxu0 0.0
    %71 = vmatpush1.msra.mxu0 0.0
    %72 = vmatprep.subr.mxu0 0.0
    %73 = vmatpush1.msra.mxu0 0.0
    %74 = vmatprep.subr.mxu0 0.0
    %75 = vmatpush1.msra.mxu0 0.0
    %76 = vmatprep.subr.mxu0 0.0
    %77 = vmatpush1.msra.mxu0 0.0
    %78 = vmatprep.subr.mxu0 0.0
    %79 = vmatpush1.msra.mxu0 0.0
    %80 = vmatprep.subr.mxu0 0.0
    %81 = vmatpush1.msra.mxu0 0.0
    %82 = vmatprep.subr.mxu0 0.0
    %83 = vmatpush1.msra.mxu0 0.0
    %84 = vmatprep.subr.mxu0 0.0
    %85 = vmatpush1.msra.mxu0 0.0
    %86 = vmatprep.subr.mxu0 0.0
    %87 = vmatpush1.msra.mxu0 0.0
    %88 = vmatprep.subr.mxu0 0.0
    %89 = vmatpush1.msra.mxu0 0.0
    %90 = vmatprep.subr.mxu0 0.0
    %91 = vmatpush1.msra.mxu0 0.0
    %92 = vmatprep.subr.mxu0 0.0
    %93 = vmatpush1.msra.mxu0 0.0
    %94 = vmatprep.mubr.f32.mxu0 0.0
    %95 = vmatmul.mubr.f32.gmra.mrb[0].mxu0 %v25
    %v96 = vpop.f32.mrb[0].mxu0
    %v97 = vadd.f32 0.0, %v96
    %v98 = vpop.f32.mrb[0].mxu0
    %99 = vmatprep.mubr.f32.mxu0 0.0
    %100 = vmatmul.mubr.f32.gmra.mrb[0].mxu0 %v28
    %v101 = vpop.f32.mrb[0].mxu0
    %v102 = vadd.f32 0.0, %v101
    %v103 = vpop.f32.mrb[0].mxu0
    %104 = vdwg.mxu0
    %105 = vst [vmem:[#allocation2] sm:$0x3] %v97
    %s106 = scalar_lea.vmem [#allocation2], 2
    %107 = vst [vmem:[%s106 - $0x2] sm:$0xc] %v97
    %s108 = scalar_lea.vmem [#allocation2], 4
    %109 = vst [vmem:[%s108 - $0x4] sm:$0x30] %v97
    %s110 = scalar_lea.vmem [#allocation2], 6
    %111 = vst [vmem:[%s110 - $0x6] sm:$0xc0] %v97
    %s112 = scalar_lea.vmem [#allocation2], 8
    %113 = vst [vmem:[%s112] sm:$0x3] %v102
    %s114 = scalar_lea.vmem [#allocation2], 10
    %115 = vst [vmem:[%s114 - $0x2] sm:$0xc] %v102
    %s116 = scalar_lea.vmem [#allocation2], 12
    %117 = vst [vmem:[%s116 - $0x4] sm:$0x30] %v102
    %s118 = scalar_lea.vmem [#allocation2], 14
    %119 = vst [vmem:[%s118 - $0x6] sm:$0xc0] %v102
    %v120 = vld [vmem:[%s2] sm:$0xff]
    %v121 = vld [vmem:[%s2 + $0x8] sm:$0xff]
    %v122 = vld [vmem:[%s2 + $0x10] sm:$0xff]
    %v123 = vld [vmem:[%s2 + $0x18] sm:$0xff]
    %v124 = vlaneseq
    %v125 = vand.u32 %v124, 127
    %vm126 = vcmp.ge.s32.totalorder %v125, 64
    %vm127 = vcmp.lt.s32.totalorder %v125, 96
    %vm128 = vmand %vm126, %vm127
    %v129 = vld [vmem:[#allocation2] sm:$0x3]
    %vm130 = vcmask 261120
    %v132 = vsel %vm130, 0.0, 0
    %134 = vmatprep.subr.mxu0 0.0
    %135 = vmatpush1.msra.mxu0 %v120
    %136 = vmatprep.subr.mxu0 0.0
    %137 = vmatpush1.msra.mxu0 %v121
    %138 = vmatprep.subr.mxu0 0.0
    %139 = vmatpush1.msra.mxu0 %v122
    %140 = vmatprep.subr.mxu0 0.0
    %141 = vmatpush1.msra.mxu0 %v123
    %142 = vmatprep.subr.mxu0 0.0
    %143 = vmatpush1.msra.mxu0 0.0
    %144 = vmatprep.subr.mxu0 0.0
    %145 = vmatpush1.msra.mxu0 0.0
    %146 = vmatprep.subr.mxu0 0.0
    %147 = vmatpush1.msra.mxu0 0.0
    %148 = vmatprep.subr.mxu0 0.0
    %149 = vmatpush1.msra.mxu0 0.0
    %150 = vmatprep.subr.mxu0 0.0
    %151 = vmatpush1.msra.mxu0 0.0
    %152 = vmatprep.subr.mxu0 0.0
    %153 = vmatpush1.msra.mxu0 0.0
    %154 = vmatprep.subr.mxu0 0.0
    %155 = vmatpush1.msra.mxu0 0.0
    %156 = vmatprep.subr.mxu0 0.0
    %157 = vmatpush1.msra.mxu0 0.0
    %158 = vmatprep.subr.mxu0 0.0
    %159 = vmatpush1.msra.mxu0 0.0
    %160 = vmatprep.subr.mxu0 0.0
    %161 = vmatpush1.msra.mxu0 0.0
    %162 = vmatprep.subr.mxu0 0.0
    %163 = vmatpush1.msra.mxu0 0.0
    %164 = vmatprep.subr.mxu0 0.0
    %165 = vmatpush1.msra.mxu0 0.0
    %166 = vmatprep.subr.mxu0 0.0
    %167 = vmatpush1.msra.mxu0 0.0
    %168 = vmatprep.subr.mxu0 0.0
    %169 = vmatpush1.msra.mxu0 0.0
    %170 = vmatprep.subr.mxu0 0.0
    %171 = vmatpush1.msra.mxu0 0.0
    %172 = vmatprep.subr.mxu0 0.0
    %173 = vmatpush1.msra.mxu0 0.0
    %174 = vmatprep.subr.mxu0 0.0
    %175 = vmatpush1.msra.mxu0 0.0
    %176 = vmatprep.subr.mxu0 0.0
    %177 = vmatpush1.msra.mxu0 0.0
    %178 = vmatprep.subr.mxu0 0.0
    %179 = vmatpush1.msra.mxu0 0.0
    %180 = vmatprep.subr.mxu0 0.0
    %181 = vmatpush1.msra.mxu0 0.0
    %182 = vmatprep.subr.mxu0 0.0
    %183 = vmatpush1.msra.mxu0 0.0
    %184 = vmatprep.subr.mxu0 0.0
    %185 = vmatpush1.msra.mxu0 0.0
    %186 = vmatprep.subr.mxu0 0.0
    %187 = vmatpush1.msra.mxu0 0.0
    %188 = vmatprep.subr.mxu0 0.0
    %189 = vmatpush1.msra.mxu0 0.0
    %190 = vmatprep.subr.mxu0 0.0
    %191 = vmatpush1.msra.mxu0 0.0
    %192 = vmatprep.subr.mxu0 0.0
    %193 = vmatpush1.msra.mxu0 0.0
    %194 = vmatprep.subr.mxu0 0.0
    %195 = vmatpush1.msra.mxu0 0.0
    %196 = vmatprep.subr.mxu0 0.0
    %197 = vmatpush1.msra.mxu0 0.0
    %198 = vmatprep.mubr.f32.mxu0 0.0
    %199 = vmatmul.mubr.f32.gmra.mrb[0].mxu0 %v132
    %v200 = vpop.f32.mrb[0].mxu0
    %v201 = vadd.f32 0.0, %v200
    %v202 = vpop.f32.mrb[0].mxu0
    %203 = vdwg.mxu0
    %v204 = vadd.f32 %v129, %v201
    %v205 = vtanh.pop %v204
    %v206 = vmul.f32 %v205, 0.5
    %v207 = vadd.f32 %v206, 0.5
    %v208 = vsel %vm128, %v205, %v207
    %v209 = vmul.f32 %v208, 0.0
    %211 = vrot.lane.b32.xlu0 %v208, 64
    %v212 = vpop.permute.xlu0 %211
    %v214 = vmul.f32 %v208, %v212
    %216 = vrot.lane.b32.xlu0 %v214, 32
    %v217 = vpop.permute.xlu0 %216
    %v219 = vadd.f32 %v209, %v217
    %v220 = vtanh.pop %v219
    %222 = vrot.lane.b32.xlu0 %v220, 64
    %v223 = vpop.permute.xlu0 %222
    %v225 = vmul.f32 %v208, %v223
    %v226 = vld [vmem:[%s106] sm:$0x3]
    %228 = vrot.lane.b32.xlu0 %v225, 32
    %v229 = vpop.permute.xlu0 %228
    %v230 = vsel %vm130, %v229, 0
    %232 = vmatprep.subr.mxu0 0.0
    %233 = vmatpush1.msra.mxu0 %v120
    %234 = vmatprep.subr.mxu0 0.0
    %235 = vmatpush1.msra.mxu0 %v121
    %236 = vmatprep.subr.mxu0 0.0
    %237 = vmatpush1.msra.mxu0 %v122
    %238 = vmatprep.subr.mxu0 0.0
    %239 = vmatpush1.msra.mxu0 %v123
    %240 = vmatprep.subr.mxu0 0.0
    %241 = vmatpush1.msra.mxu0 0.0
    %242 = vmatprep.subr.mxu0 0.0
    %243 = vmatpush1.msra.mxu0 0.0
    %244 = vmatprep.subr.mxu0 0.0
    %245 = vmatpush1.msra.mxu0 0.0
    %246 = vmatprep.subr.mxu0 0.0
    %247 = vmatpush1.msra.mxu0 0.0
    %248 = vmatprep.subr.mxu0 0.0
    %249 = vmatpush1.msra.mxu0 0.0
    %250 = vmatprep.subr.mxu0 0.0
    %251 = vmatpush1.msra.mxu0 0.0
    %252 = vmatprep.subr.mxu0 0.0
    %253 = vmatpush1.msra.mxu0 0.0
    %254 = vmatprep.subr.mxu0 0.0
    %255 = vmatpush1.msra.mxu0 0.0
    %256 = vmatprep.subr.mxu0 0.0
    %257 = vmatpush1.msra.mxu0 0.0
    %258 = vmatprep.subr.mxu0 0.0
    %259 = vmatpush1.msra.mxu0 0.0
    %260 = vmatprep.subr.mxu0 0.0
    %261 = vmatpush1.msra.mxu0 0.0
    %262 = vmatprep.subr.mxu0 0.0
    %263 = vmatpush1.msra.mxu0 0.0
    %264 = vmatprep.subr.mxu0 0.0
    %265 = vmatpush1.msra.mxu0 0.0
    %266 = vmatprep.subr.mxu0 0.0
    %267 = vmatpush1.msra.mxu0 0.0
    %268 = vmatprep.subr.mxu0 0.0
    %269 = vmatpush1.msra.mxu0 0.0
    %270 = vmatprep.subr.mxu0 0.0
    %271 = vmatpush1.msra.mxu0 0.0
    %272 = vmatprep.subr.mxu0 0.0
    %273 = vmatpush1.msra.mxu0 0.0
    %274 = vmatprep.subr.mxu0 0.0
    %275 = vmatpush1.msra.mxu0 0.0
    %276 = vmatprep.subr.mxu0 0.0
    %277 = vmatpush1.msra.mxu0 0.0
    %278 = vmatprep.subr.mxu0 0.0
    %279 = vmatpush1.msra.mxu0 0.0
    %280 = vmatprep.subr.mxu0 0.0
    %281 = vmatpush1.msra.mxu0 0.0
    %282 = vmatprep.subr.mxu0 0.0
    %283 = vmatpush1.msra.mxu0 0.0
    %284 = vmatprep.subr.mxu0 0.0
    %285 = vmatpush1.msra.mxu0 0.0
    %286 = vmatprep.subr.mxu0 0.0
    %287 = vmatpush1.msra.mxu0 0.0
    %288 = vmatprep.subr.mxu0 0.0
    %289 = vmatpush1.msra.mxu0 0.0
    %290 = vmatprep.subr.mxu0 0.0
    %291 = vmatpush1.msra.mxu0 0.0
    %292 = vmatprep.subr.mxu0 0.0
    %293 = vmatpush1.msra.mxu0 0.0
    %294 = vmatprep.subr.mxu0 0.0
    %295 = vmatpush1.msra.mxu0 0.0
    %296 = vmatprep.mubr.f32.mxu0 0.0
    %297 = vmatmul.mubr.f32.gmra.mrb[0].mxu0 %v230
    %v298 = vpop.f32.mrb[0].mxu0
    %v299 = vadd.f32 0.0, %v298
    %v300 = vpop.f32.mrb[0].mxu0
    %301 = vdwg.mxu0
    %v302 = vadd.f32 %v226, %v299
    %v303 = vtanh.pop %v302
    %v304 = vmul.f32 %v303, 0.5
    %v305 = vadd.f32 %v304, 0.5
    %v306 = vsel %vm128, %v303, %v305
    %v307 = vmul.f32 %v306, %v219
    %309 = vrot.lane.b32.xlu0 %v306, 64
    %v310 = vpop.permute.xlu0 %309
    %v312 = vmul.f32 %v306, %v310
    %314 = vrot.lane.b32.xlu0 %v312, 32
    %v315 = vpop.permute.xlu0 %314
    %v317 = vadd.f32 %v307, %v315
    %v318 = vtanh.pop %v317
    %320 = vrot.lane.b32.xlu0 %v318, 64
    %v321 = vpop.permute.xlu0 %320
    %v323 = vmul.f32 %v306, %v321
    %v324 = vld [vmem:[%s108] sm:$0x3]
    %326 = vrot.lane.b32.xlu0 %v323, 32
    %v327 = vpop.permute.xlu0 %326
    %v328 = vsel %vm130, %v327, 0
    %330 = vmatprep.subr.mxu0 0.0
    %331 = vmatpush1.msra.mxu0 %v120
    %332 = vmatprep.subr.mxu0 0.0
    %333 = vmatpush1.msra.mxu0 %v121
    %334 = vmatprep.subr.mxu0 0.0
    %335 = vmatpush1.msra.mxu0 %v122
    %336 = vmatprep.subr.mxu0 0.0
    %337 = vmatpush1.msra.mxu0 %v123
    %338 = vmatprep.subr.mxu0 0.0
    %339 = vmatpush1.msra.mxu0 0.0
    %340 = vmatprep.subr.mxu0 0.0
    %341 = vmatpush1.msra.mxu0 0.0
    %342 = vmatprep.subr.mxu0 0.0
    %343 = vmatpush1.msra.mxu0 0.0
    %344 = vmatprep.subr.mxu0 0.0
    %345 = vmatpush1.msra.mxu0 0.0
    %346 = vmatprep.subr.mxu0 0.0
    %347 = vmatpush1.msra.mxu0 0.0
    %348 = vmatprep.subr.mxu0 0.0
    %349 = vmatpush1.msra.mxu0 0.0
    %350 = vmatprep.subr.mxu0 0.0
    %351 = vmatpush1.msra.mxu0 0.0
    %352 = vmatprep.subr.mxu0 0.0
    %353 = vmatpush1.msra.mxu0 0.0
    %354 = vmatprep.subr.mxu0 0.0
    %355 = vmatpush1.msra.mxu0 0.0
    %356 = vmatprep.subr.mxu0 0.0
    %357 = vmatpush1.msra.mxu0 0.0
    %358 = vmatprep.subr.mxu0 0.0
    %359 = vmatpush1.msra.mxu0 0.0
    %360 = vmatprep.subr.mxu0 0.0
    %361 = vmatpush1.msra.mxu0 0.0
    %362 = vmatprep.subr.mxu0 0.0
    %363 = vmatpush1.msra.mxu0 0.0
    %364 = vmatprep.subr.mxu0 0.0
    %365 = vmatpush1.msra.mxu0 0.0
    %366 = vmatprep.subr.mxu0 0.0
    %367 = vmatpush1.msra.mxu0 0.0
    %368 = vmatprep.subr.mxu0 0.0
    %369 = vmatpush1.msra.mxu0 0.0
    %370 = vmatprep.subr.mxu0 0.0
    %371 = vmatpush1.msra.mxu0 0.0
    %372 = vmatprep.subr.mxu0 0.0
    %373 = vmatpush1.msra.mxu0 0.0
    %374 = vmatprep.subr.mxu0 0.0
    %375 = vmatpush1.msra.mxu0 0.0
    %376 = vmatprep.subr.mxu0 0.0
    %377 = vmatpush1.msra.mxu0 0.0
    %378 = vmatprep.subr.mxu0 0.0
    %379 = vmatpush1.msra.mxu0 0.0
    %380 = vmatprep.subr.mxu0 0.0
    %381 = vmatpush1.msra.mxu0 0.0
    %382 = vmatprep.subr.mxu0 0.0
    %383 = vmatpush1.msra.mxu0 0.0
    %384 = vmatprep.subr.mxu0 0.0
    %385 = vmatpush1.msra.mxu0 0.0
    %386 = vmatprep.subr.mxu0 0.0
    %387 = vmatpush1.msra.mxu0 0.0
    %388 = vmatprep.subr.mxu0 0.0
    %389 = vmatpush1.msra.mxu0 0.0
    %390 = vmatprep.subr.mxu0 0.0
    %391 = vmatpush1.msra.mxu0 0.0
    %392 = vmatprep.subr.mxu0 0.0
    %393 = vmatpush1.msra.mxu0 0.0
    %394 = vmatprep.mubr.f32.mxu0 0.0
    %395 = vmatmul.mubr.f32.gmra.mrb[0].mxu0 %v328
    %v396 = vpop.f32.mrb[0].mxu0
    %v397 = vadd.f32 0.0, %v396
    %v398 = vpop.f32.mrb[0].mxu0
    %399 = vdwg.mxu0
    %v400 = vadd.f32 %v324, %v397
    %v401 = vtanh.pop %v400
    %v402 = vmul.f32 %v401, 0.5
    %v403 = vadd.f32 %v402, 0.5
    %v404 = vsel %vm128, %v401, %v403
    %v405 = vmul.f32 %v404, %v317
    %407 = vrot.lane.b32.xlu0 %v404, 64
    %v408 = vpop.permute.xlu0 %407
    %v410 = vmul.f32 %v404, %v408
    %412 = vrot.lane.b32.xlu0 %v410, 32
    %v413 = vpop.permute.xlu0 %412
    %v415 = vadd.f32 %v405, %v413
    %v416 = vtanh.pop %v415
    %418 = vrot.lane.b32.xlu0 %v416, 64
    %v419 = vpop.permute.xlu0 %418
    %v421 = vmul.f32 %v404, %v419
    %v422 = vld [vmem:[%s110] sm:$0x3]
    %424 = vrot.lane.b32.xlu0 %v421, 32
    %v425 = vpop.permute.xlu0 %424
    %v426 = vsel %vm130, %v425, 0
    %428 = vmatprep.subr.mxu0 0.0
    %429 = vmatpush1.msra.mxu0 %v120
    %430 = vmatprep.subr.mxu0 0.0
    %431 = vmatpush1.msra.mxu0 %v121
    %432 = vmatprep.subr.mxu0 0.0
    %433 = vmatpush1.msra.mxu0 %v122
    %434 = vmatprep.subr.mxu0 0.0
    %435 = vmatpush1.msra.mxu0 %v123
    %436 = vmatprep.subr.mxu0 0.0
    %437 = vmatpush1.msra.mxu0 0.0
    %438 = vmatprep.subr.mxu0 0.0
    %439 = vmatpush1.msra.mxu0 0.0
    %440 = vmatprep.subr.mxu0 0.0
    %441 = vmatpush1.msra.mxu0 0.0
    %442 = vmatprep.subr.mxu0 0.0
    %443 = vmatpush1.msra.mxu0 0.0
    %444 = vmatprep.subr.mxu0 0.0
    %445 = vmatpush1.msra.mxu0 0.0
    %446 = vmatprep.subr.mxu0 0.0
    %447 = vmatpush1.msra.mxu0 0.0
    %448 = vmatprep.subr.mxu0 0.0
    %449 = vmatpush1.msra.mxu0 0.0
    %450 = vmatprep.subr.mxu0 0.0
    %451 = vmatpush1.msra.mxu0 0.0
    %452 = vmatprep.subr.mxu0 0.0
    %453 = vmatpush1.msra.mxu0 0.0
    %454 = vmatprep.subr.mxu0 0.0
    %455 = vmatpush1.msra.mxu0 0.0
    %456 = vmatprep.subr.mxu0 0.0
    %457 = vmatpush1.msra.mxu0 0.0
    %458 = vmatprep.subr.mxu0 0.0
    %459 = vmatpush1.msra.mxu0 0.0
    %460 = vmatprep.subr.mxu0 0.0
    %461 = vmatpush1.msra.mxu0 0.0
    %462 = vmatprep.subr.mxu0 0.0
    %463 = vmatpush1.msra.mxu0 0.0
    %464 = vmatprep.subr.mxu0 0.0
    %465 = vmatpush1.msra.mxu0 0.0
    %466 = vmatprep.subr.mxu0 0.0
    %467 = vmatpush1.msra.mxu0 0.0
    %468 = vmatprep.subr.mxu0 0.0
    %469 = vmatpush1.msra.mxu0 0.0
    %470 = vmatprep.subr.mxu0 0.0
    %471 = vmatpush1.msra.mxu0 0.0
    %472 = vmatprep.subr.mxu0 0.0
    %473 = vmatpush1.msra.mxu0 0.0
    %474 = vmatprep.subr.mxu0 0.0
    %475 = vmatpush1.msra.mxu0 0.0
    %476 = vmatprep.subr.mxu0 0.0
    %477 = vmatpush1.msra.mxu0 0.0
    %478 = vmatprep.subr.mxu0 0.0
    %479 = vmatpush1.msra.mxu0 0.0
    %480 = vmatprep.subr.mxu0 0.0
    %481 = vmatpush1.msra.mxu0 0.0
    %482 = vmatprep.subr.mxu0 0.0
    %483 = vmatpush1.msra.mxu0 0.0
    %484 = vmatprep.subr.mxu0 0.0
    %485 = vmatpush1.msra.mxu0 0.0
    %486 = vmatprep.subr.mxu0 0.0
    %487 = vmatpush1.msra.mxu0 0.0
    %488 = vmatprep.subr.mxu0 0.0
    %489 = vmatpush1.msra.mxu0 0.0
    %490 = vmatprep.subr.mxu0 0.0
    %491 = vmatpush1.msra.mxu0 0.0
    %492 = vmatprep.mubr.f32.mxu0 0.0
    %493 = vmatmul.mubr.f32.gmra.mrb[0].mxu0 %v426
    %v494 = vpop.f32.mrb[0].mxu0
    %v495 = vadd.f32 0.0, %v494
    %v496 = vpop.f32.mrb[0].mxu0
    %497 = vdwg.mxu0
    %v498 = vadd.f32 %v422, %v495
    %v499 = vtanh.pop %v498
    %v500 = vmul.f32 %v499, 0.5
    %v501 = vadd.f32 %v500, 0.5
    %v502 = vsel %vm128, %v499, %v501
    %v503 = vmul.f32 %v502, %v415
    %505 = vrot.lane.b32.xlu0 %v502, 64
    %v506 = vpop.permute.xlu0 %505
    %v508 = vmul.f32 %v502, %v506
    %510 = vrot.lane.b32.xlu0 %v508, 32
    %v511 = vpop.permute.xlu0 %510
    %v513 = vadd.f32 %v503, %v511
    %v514 = vtanh.pop %v513
    %516 = vrot.lane.b32.xlu0 %v514, 64
    %v517 = vpop.permute.xlu0 %516
    %v519 = vmul.f32 %v502, %v517
    %v520 = vld [vmem:[%s112] sm:$0x3]
    %522 = vrot.lane.b32.xlu0 %v519, 32
    %v523 = vpop.permute.xlu0 %522
    %v524 = vsel %vm130, %v523, 0
    %526 = vmatprep.subr.mxu0 0.0
    %527 = vmatpush1.msra.mxu0 %v120
    %528 = vmatprep.subr.mxu0 0.0
    %529 = vmatpush1.msra.mxu0 %v121
    %530 = vmatprep.subr.mxu0 0.0
    %531 = vmatpush1.msra.mxu0 %v122
    %532 = vmatprep.subr.mxu0 0.0
    %533 = vmatpush1.msra.mxu0 %v123
    %534 = vmatprep.subr.mxu0 0.0
    %535 = vmatpush1.msra.mxu0 0.0
    %536 = vmatprep.subr.mxu0 0.0
    %537 = vmatpush1.msra.mxu0 0.0
    %538 = vmatprep.subr.mxu0 0.0
    %539 = vmatpush1.msra.mxu0 0.0
    %540 = vmatprep.subr.mxu0 0.0
    %541 = vmatpush1.msra.mxu0 0.0
    %542 = vmatprep.subr.mxu0 0.0
    %543 = vmatpush1.msra.mxu0 0.0
    %544 = vmatprep.subr.mxu0 0.0
    %545 = vmatpush1.msra.mxu0 0.0
    %546 = vmatprep.subr.mxu0 0.0
    %547 = vmatpush1.msra.mxu0 0.0
    %548 = vmatprep.subr.mxu0 0.0
    %549 = vmatpush1.msra.mxu0 0.0
    %550 = vmatprep.subr.mxu0 0.0
    %551 = vmatpush1.msra.mxu0 0.0
    %552 = vmatprep.subr.mxu0 0.0
    %553 = vmatpush1.msra.mxu0 0.0
    %554 = vmatprep.subr.mxu0 0.0
    %555 = vmatpush1.msra.mxu0 0.0
    %556 = vmatprep.subr.mxu0 0.0
    %557 = vmatpush1.msra.mxu0 0.0
    %558 = vmatprep.subr.mxu0 0.0
    %559 = vmatpush1.msra.mxu0 0.0
    %560 = vmatprep.subr.mxu0 0.0
    %561 = vmatpush1.msra.mxu0 0.0
    %562 = vmatprep.subr.mxu0 0.0
    %563 = vmatpush1.msra.mxu0 0.0
    %564 = vmatprep.subr.mxu0 0.0
    %565 = vmatpush1.msra.mxu0 0.0
    %566 = vmatprep.subr.mxu0 0.0
    %567 = vmatpush1.msra.mxu0 0.0
    %568 = vmatprep.subr.mxu0 0.0
    %569 = vmatpush1.msra.mxu0 0.0
    %570 = vmatprep.subr.mxu0 0.0
    %571 = vmatpush1.msra.mxu0 0.0
    %572 = vmatprep.subr.mxu0 0.0
    %573 = vmatpush1.msra.mxu0 0.0
    %574 = vmatprep.subr.mxu0 0.0
    %575 = vmatpush1.msra.mxu0 0.0
    %576 = vmatprep.subr.mxu0 0.0
    %577 = vmatpush1.msra.mxu0 0.0
    %578 = vmatprep.subr.mxu0 0.0
    %579 = vmatpush1.msra.mxu0 0.0
    %580 = vmatprep.subr.mxu0 0.0
    %581 = vmatpush1.msra.mxu0 0.0
    %582 = vmatprep.subr.mxu0 0.0
    %583 = vmatpush1.msra.mxu0 0.0
    %584 = vmatprep.subr.mxu0 0.0
    %585 = vmatpush1.msra.mxu0 0.0
    %586 = vmatprep.subr.mxu0 0.0
    %587 = vmatpush1.msra.mxu0 0.0
    %588 = vmatprep.subr.mxu0 0.0
    %589 = vmatpush1.msra.mxu0 0.0
    %590 = vmatprep.mubr.f32.mxu0 0.0
    %591 = vmatmul.mubr.f32.gmra.mrb[0].mxu0 %v524
    %v592 = vpop.f32.mrb[0].mxu0
    %v593 = vadd.f32 0.0, %v592
    %v594 = vpop.f32.mrb[0].mxu0
    %595 = vdwg.mxu0
    %v596 = vadd.f32 %v520, %v593
    %v597 = vtanh.pop %v596
    %v598 = vmul.f32 %v597, 0.5
    %v599 = vadd.f32 %v598, 0.5
    %v600 = vsel %vm128, %v597, %v599
    %v601 = vmul.f32 %v600, %v513
    %603 = vrot.lane.b32.xlu0 %v600, 64
    %v604 = vpop.permute.xlu0 %603
    %v606 = vmul.f32 %v600, %v604
    %608 = vrot.lane.b32.xlu0 %v606, 32
    %v609 = vpop.permute.xlu0 %608
    %v611 = vadd.f32 %v601, %v609
    %v612 = vtanh.pop %v611
    %614 = vrot.lane.b32.xlu0 %v612, 64
    %v615 = vpop.permute.xlu0 %614
    %v617 = vmul.f32 %v600, %v615
    %v618 = vld [vmem:[%s114] sm:$0x3]
    %620 = vrot.lane.b32.xlu0 %v617, 32
    %v621 = vpop.permute.xlu0 %620
    %v622 = vsel %vm130, %v621, 0
    %624 = vmatprep.subr.mxu0 0.0
    %625 = vmatpush1.msra.mxu0 %v120
    %626 = vmatprep.subr.mxu0 0.0
    %627 = vmatpush1.msra.mxu0 %v121
    %628 = vmatprep.subr.mxu0 0.0
    %629 = vmatpush1.msra.mxu0 %v122
    %630 = vmatprep.subr.mxu0 0.0
    %631 = vmatpush1.msra.mxu0 %v123
    %632 = vmatprep.subr.mxu0 0.0
    %633 = vmatpush1.msra.mxu0 0.0
    %634 = vmatprep.subr.mxu0 0.0
    %635 = vmatpush1.msra.mxu0 0.0
    %636 = vmatprep.subr.mxu0 0.0
    %637 = vmatpush1.msra.mxu0 0.0
    %638 = vmatprep.subr.mxu0 0.0
    %639 = vmatpush1.msra.mxu0 0.0
    %640 = vmatprep.subr.mxu0 0.0
    %641 = vmatpush1.msra.mxu0 0.0
    %642 = vmatprep.subr.mxu0 0.0
    %643 = vmatpush1.msra.mxu0 0.0
    %644 = vmatprep.subr.mxu0 0.0
    %645 = vmatpush1.msra.mxu0 0.0
    %646 = vmatprep.subr.mxu0 0.0
    %647 = vmatpush1.msra.mxu0 0.0
    %648 = vmatprep.subr.mxu0 0.0
    %649 = vmatpush1.msra.mxu0 0.0
    %650 = vmatprep.subr.mxu0 0.0
    %651 = vmatpush1.msra.mxu0 0.0
    %652 = vmatprep.subr.mxu0 0.0
    %653 = vmatpush1.msra.mxu0 0.0
    %654 = vmatprep.subr.mxu0 0.0
    %655 = vmatpush1.msra.mxu0 0.0
    %656 = vmatprep.subr.mxu0 0.0
    %657 = vmatpush1.msra.mxu0 0.0
    %658 = vmatprep.subr.mxu0 0.0
    %659 = vmatpush1.msra.mxu0 0.0
    %660 = vmatprep.subr.mxu0 0.0
    %661 = vmatpush1.msra.mxu0 0.0
    %662 = vmatprep.subr.mxu0 0.0
    %663 = vmatpush1.msra.mxu0 0.0
    %664 = vmatprep.subr.mxu0 0.0
    %665 = vmatpush1.msra.mxu0 0.0
    %666 = vmatprep.subr.mxu0 0.0
    %667 = vmatpush1.msra.mxu0 0.0
    %668 = vmatprep.subr.mxu0 0.0
    %669 = vmatpush1.msra.mxu0 0.0
    %670 = vmatprep.subr.mxu0 0.0
    %671 = vmatpush1.msra.mxu0 0.0
    %672 = vmatprep.subr.mxu0 0.0
    %673 = vmatpush1.msra.mxu0 0.0
    %674 = vmatprep.subr.mxu0 0.0
    %675 = vmatpush1.msra.mxu0 0.0
    %676 = vmatprep.subr.mxu0 0.0
    %677 = vmatpush1.msra.mxu0 0.0
    %678 = vmatprep.subr.mxu0 0.0
    %679 = vmatpush1.msra.mxu0 0.0
    %680 = vmatprep.subr.mxu0 0.0
    %681 = vmatpush1.msra.mxu0 0.0
    %682 = vmatprep.subr.mxu0 0.0
    %683 = vmatpush1.msra.mxu0 0.0
    %684 = vmatprep.subr.mxu0 0.0
    %685 = vmatpush1.msra.mxu0 0.0
    %686 = vmatprep.subr.mxu0 0.0
    %687 = vmatpush1.msra.mxu0 0.0
    %688 = vmatprep.mubr.f32.mxu0 0.0
    %689 = vmatmul.mubr.f32.gmra.mrb[0].mxu0 %v622
    %v690 = vpop.f32.mrb[0].mxu0
    %v691 = vadd.f32 0.0, %v690
    %v692 = vpop.f32.mrb[0].mxu0
    %693 = vdwg.mxu0
    %v694 = vadd.f32 %v618, %v691
    %v695 = vtanh.pop %v694
    %v696 = vmul.f32 %v695, 0.5
    %v697 = vadd.f32 %v696, 0.5
    %v698 = vsel %vm128, %v695, %v697
    %v699 = vmul.f32 %v698, %v611
    %701 = vrot.lane.b32.xlu0 %v698, 64
    %v702 = vpop.permute.xlu0 %701
    %v704 = vmul.f32 %v698, %v702
    %706 = vrot.lane.b32.xlu0 %v704, 32
    %v707 = vpop.permute.xlu0 %706
    %v709 = vadd.f32 %v699, %v707
    %v710 = vtanh.pop %v709
    %712 = vrot.lane.b32.xlu0 %v710, 64
    %v713 = vpop.permute.xlu0 %712
    %v715 = vmul.f32 %v698, %v713
    %v716 = vld [vmem:[%s116] sm:$0x3]
    %718 = vrot.lane.b32.xlu0 %v715, 32
    %v719 = vpop.permute.xlu0 %718
    %v720 = vsel %vm130, %v719, 0
    %722 = vmatprep.subr.mxu0 0.0
    %723 = vmatpush1.msra.mxu0 %v120
    %724 = vmatprep.subr.mxu0 0.0
    %725 = vmatpush1.msra.mxu0 %v121
    %726 = vmatprep.subr.mxu0 0.0
    %727 = vmatpush1.msra.mxu0 %v122
    %728 = vmatprep.subr.mxu0 0.0
    %729 = vmatpush1.msra.mxu0 %v123
    %730 = vmatprep.subr.mxu0 0.0
    %731 = vmatpush1.msra.mxu0 0.0
    %732 = vmatprep.subr.mxu0 0.0
    %733 = vmatpush1.msra.mxu0 0.0
    %734 = vmatprep.subr.mxu0 0.0
    %735 = vmatpush1.msra.mxu0 0.0
    %736 = vmatprep.subr.mxu0 0.0
    %737 = vmatpush1.msra.mxu0 0.0
    %738 = vmatprep.subr.mxu0 0.0
    %739 = vmatpush1.msra.mxu0 0.0
    %740 = vmatprep.subr.mxu0 0.0
    %741 = vmatpush1.msra.mxu0 0.0
    %742 = vmatprep.subr.mxu0 0.0
    %743 = vmatpush1.msra.mxu0 0.0
    %744 = vmatprep.subr.mxu0 0.0
    %745 = vmatpush1.msra.mxu0 0.0
    %746 = vmatprep.subr.mxu0 0.0
    %747 = vmatpush1.msra.mxu0 0.0
    %748 = vmatprep.subr.mxu0 0.0
    %749 = vmatpush1.msra.mxu0 0.0
    %750 = vmatprep.subr.mxu0 0.0
    %751 = vmatpush1.msra.mxu0 0.0
    %752 = vmatprep.subr.mxu0 0.0
    %753 = vmatpush1.msra.mxu0 0.0
    %754 = vmatprep.subr.mxu0 0.0
    %755 = vmatpush1.msra.mxu0 0.0
    %756 = vmatprep.subr.mxu0 0.0
    %757 = vmatpush1.msra.mxu0 0.0
    %758 = vmatprep.subr.mxu0 0.0
    %759 = vmatpush1.msra.mxu0 0.0
    %760 = vmatprep.subr.mxu0 0.0
    %761 = vmatpush1.msra.mxu0 0.0
    %762 = vmatprep.subr.mxu0 0.0
    %763 = vmatpush1.msra.mxu0 0.0
    %764 = vmatprep.subr.mxu0 0.0
    %765 = vmatpush1.msra.mxu0 0.0
    %766 = vmatprep.subr.mxu0 0.0
    %767 = vmatpush1.msra.mxu0 0.0
    %768 = vmatprep.subr.mxu0 0.0
    %769 = vmatpush1.msra.mxu0 0.0
    %770 = vmatprep.subr.mxu0 0.0
    %771 = vmatpush1.msra.mxu0 0.0
    %772 = vmatprep.subr.mxu0 0.0
    %773 = vmatpush1.msra.mxu0 0.0
    %774 = vmatprep.subr.mxu0 0.0
    %775 = vmatpush1.msra.mxu0 0.0
    %776 = vmatprep.subr.mxu0 0.0
    %777 = vmatpush1.msra.mxu0 0.0
    %778 = vmatprep.subr.mxu0 0.0
    %779 = vmatpush1.msra.mxu0 0.0
    %780 = vmatprep.subr.mxu0 0.0
    %781 = vmatpush1.msra.mxu0 0.0
    %782 = vmatprep.subr.mxu0 0.0
    %783 = vmatpush1.msra.mxu0 0.0
    %784 = vmatprep.subr.mxu0 0.0
    %785 = vmatpush1.msra.mxu0 0.0
    %786 = vmatprep.mubr.f32.mxu0 0.0
    %787 = vmatmul.mubr.f32.gmra.mrb[0].mxu0 %v720
    %v788 = vpop.f32.mrb[0].mxu0
    %v789 = vadd.f32 0.0, %v788
    %v790 = vpop.f32.mrb[0].mxu0
    %791 = vdwg.mxu0
    %v792 = vadd.f32 %v716, %v789
    %v793 = vtanh.pop %v792
    %v794 = vmul.f32 %v793, 0.5
    %v795 = vadd.f32 %v794, 0.5
    %v796 = vsel %vm128, %v793, %v795
    %v797 = vmul.f32 %v796, %v709
    %799 = vrot.lane.b32.xlu0 %v796, 64
    %v800 = vpop.permute.xlu0 %799
    %v802 = vmul.f32 %v796, %v800
    %804 = vrot.lane.b32.xlu0 %v802, 32
    %v805 = vpop.permute.xlu0 %804
    %v807 = vadd.f32 %v797, %v805
    %v808 = vtanh.pop %v807
    %810 = vrot.lane.b32.xlu0 %v808, 64
    %v811 = vpop.permute.xlu0 %810
    %v813 = vmul.f32 %v796, %v811
    %v814 = vld [vmem:[%s118] sm:$0x3]
    %816 = vrot.lane.b32.xlu0 %v813, 32
    %v817 = vpop.permute.xlu0 %816
    %v818 = vsel %vm130, %v817, 0
    %820 = vmatprep.subr.mxu0 0.0
    %821 = vmatpush1.msra.mxu0 %v120
    %822 = vmatprep.subr.mxu0 0.0
    %823 = vmatpush1.msra.mxu0 %v121
    %824 = vmatprep.subr.mxu0 0.0
    %825 = vmatpush1.msra.mxu0 %v122
    %826 = vmatprep.subr.mxu0 0.0
    %827 = vmatpush1.msra.mxu0 %v123
    %828 = vmatprep.subr.mxu0 0.0
    %829 = vmatpush1.msra.mxu0 0.0
    %830 = vmatprep.subr.mxu0 0.0
    %831 = vmatpush1.msra.mxu0 0.0
    %832 = vmatprep.subr.mxu0 0.0
    %833 = vmatpush1.msra.mxu0 0.0
    %834 = vmatprep.subr.mxu0 0.0
    %835 = vmatpush1.msra.mxu0 0.0
    %836 = vmatprep.subr.mxu0 0.0
    %837 = vmatpush1.msra.mxu0 0.0
    %838 = vmatprep.subr.mxu0 0.0
    %839 = vmatpush1.msra.mxu0 0.0
    %840 = vmatprep.subr.mxu0 0.0
    %841 = vmatpush1.msra.mxu0 0.0
    %842 = vmatprep.subr.mxu0 0.0
    %843 = vmatpush1.msra.mxu0 0.0
    %844 = vmatprep.subr.mxu0 0.0
    %845 = vmatpush1.msra.mxu0 0.0
    %846 = vmatprep.subr.mxu0 0.0
    %847 = vmatpush1.msra.mxu0 0.0
    %848 = vmatprep.subr.mxu0 0.0
    %849 = vmatpush1.msra.mxu0 0.0
    %850 = vmatprep.subr.mxu0 0.0
    %851 = vmatpush1.msra.mxu0 0.0
    %852 = vmatprep.subr.mxu0 0.0
    %853 = vmatpush1.msra.mxu0 0.0
    %854 = vmatprep.subr.mxu0 0.0
    %855 = vmatpush1.msra.mxu0 0.0
    %856 = vmatprep.subr.mxu0 0.0
    %857 = vmatpush1.msra.mxu0 0.0
    %858 = vmatprep.subr.mxu0 0.0
    %859 = vmatpush1.msra.mxu0 0.0
    %860 = vmatprep.subr.mxu0 0.0
    %861 = vmatpush1.msra.mxu0 0.0
    %862 = vmatprep.subr.mxu0 0.0
    %863 = vmatpush1.msra.mxu0 0.0
    %864 = vmatprep.subr.mxu0 0.0
    %865 = vmatpush1.msra.mxu0 0.0
    %866 = vmatprep.subr.mxu0 0.0
    %867 = vmatpush1.msra.mxu0 0.0
    %868 = vmatprep.subr.mxu0 0.0
    %869 = vmatpush1.msra.mxu0 0.0
    %870 = vmatprep.subr.mxu0 0.0
    %871 = vmatpush1.msra.mxu0 0.0
    %872 = vmatprep.subr.mxu0 0.0
    %873 = vmatpush1.msra.mxu0 0.0
    %874 = vmatprep.subr.mxu0 0.0
    %875 = vmatpush1.msra.mxu0 0.0
    %876 = vmatprep.subr.mxu0 0.0
    %877 = vmatpush1.msra.mxu0 0.0
    %878 = vmatprep.subr.mxu0 0.0
    %879 = vmatpush1.msra.mxu0 0.0
    %880 = vmatprep.subr.mxu0 0.0
    %881 = vmatpush1.msra.mxu0 0.0
    %882 = vmatprep.subr.mxu0 0.0
    %883 = vmatpush1.msra.mxu0 0.0
    %884 = vmatprep.mubr.f32.mxu0 0.0
    %885 = vmatmul.mubr.f32.gmra.mrb[0].mxu0 %v818
    %v886 = vpop.f32.mrb[0].mxu0
    %v887 = vadd.f32 0.0, %v886
    %v888 = vpop.f32.mrb[0].mxu0
    %889 = vdwg.mxu0
    %v890 = vadd.f32 %v814, %v887
    %v891 = vtanh.pop %v890
    %v892 = vmul.f32 %v891, 0.5
    %v893 = vadd.f32 %v892, 0.5
    %v894 = vsel %vm128, %v891, %v893
    %v895 = vmul.f32 %v894, %v807
    %897 = vrot.lane.b32.xlu0 %v894, 64
    %v898 = vpop.permute.xlu0 %897
    %v900 = vmul.f32 %v894, %v898
    %902 = vrot.lane.b32.xlu0 %v900, 32
    %v903 = vpop.permute.xlu0 %902
    %v905 = vadd.f32 %v895, %v903
    %v906 = vtanh.pop %v905
    %908 = vrot.lane.b32.xlu0 %v906, 64
    %v909 = vpop.permute.xlu0 %908
    %v911 = vmul.f32 %v894, %v909
    %v912 = vld [vmem:[%s3] sm:$0xff]
    %v913 = vld [vmem:[%s3 + $0x8] sm:$0xff]
    %v914 = vld [vmem:[%s3 + $0x10] sm:$0xff]
    %v915 = vld [vmem:[%s3 + $0x18] sm:$0xff]
    %v916 = vld [vmem:[%s3 + $0x20] sm:$0x1]
    %v917 = vlaneseq
    %v918 = vshrl.u32 %v917, 7
    %v919 = vsub.s32 0, %v918
    %v920 = vrot.slane %v916, %v919
    %922 = vrot.lane.b32.xlu0 %v911, 32
    %v923 = vpop.permute.xlu0 %922
    %v924 = vsel %vm130, %v923, 0
    %926 = vmatprep.subr.mxu0 0.0
    %927 = vmatpush1.msra.mxu0 %v912
    %928 = vmatprep.subr.mxu0 0.0
    %929 = vmatpush1.msra.mxu0 %v913
    %930 = vmatprep.subr.mxu0 0.0
    %931 = vmatpush1.msra.mxu0 %v914
    %932 = vmatprep.subr.mxu0 0.0
    %933 = vmatpush1.msra.mxu0 %v915
    %934 = vmatprep.subr.mxu0 0.0
    %935 = vmatpush1.msra.mxu0 0.0
    %936 = vmatprep.subr.mxu0 0.0
    %937 = vmatpush1.msra.mxu0 0.0
    %938 = vmatprep.subr.mxu0 0.0
    %939 = vmatpush1.msra.mxu0 0.0
    %940 = vmatprep.subr.mxu0 0.0
    %941 = vmatpush1.msra.mxu0 0.0
    %942 = vmatprep.subr.mxu0 0.0
    %943 = vmatpush1.msra.mxu0 0.0
    %944 = vmatprep.subr.mxu0 0.0
    %945 = vmatpush1.msra.mxu0 0.0
    %946 = vmatprep.subr.mxu0 0.0
    %947 = vmatpush1.msra.mxu0 0.0
    %948 = vmatprep.subr.mxu0 0.0
    %949 = vmatpush1.msra.mxu0 0.0
    %950 = vmatprep.subr.mxu0 0.0
    %951 = vmatpush1.msra.mxu0 0.0
    %952 = vmatprep.subr.mxu0 0.0
    %953 = vmatpush1.msra.mxu0 0.0
    %954 = vmatprep.subr.mxu0 0.0
    %955 = vmatpush1.msra.mxu0 0.0
    %956 = vmatprep.subr.mxu0 0.0
    %957 = vmatpush1.msra.mxu0 0.0
    %958 = vmatprep.subr.mxu0 0.0
    %959 = vmatpush1.msra.mxu0 0.0
    %960 = vmatprep.subr.mxu0 0.0
    %961 = vmatpush1.msra.mxu0 0.0
    %962 = vmatprep.subr.mxu0 0.0
    %963 = vmatpush1.msra.mxu0 0.0
    %964 = vmatprep.subr.mxu0 0.0
    %965 = vmatpush1.msra.mxu0 0.0
    %966 = vmatprep.subr.mxu0 0.0
    %967 = vmatpush1.msra.mxu0 0.0
    %968 = vmatprep.subr.mxu0 0.0
    %969 = vmatpush1.msra.mxu0 0.0
    %970 = vmatprep.subr.mxu0 0.0
    %971 = vmatpush1.msra.mxu0 0.0
    %972 = vmatprep.subr.mxu0 0.0
    %973 = vmatpush1.msra.mxu0 0.0
    %974 = vmatprep.subr.mxu0 0.0
    %975 = vmatpush1.msra.mxu0 0.0
    %976 = vmatprep.subr.mxu0 0.0
    %977 = vmatpush1.msra.mxu0 0.0
    %978 = vmatprep.subr.mxu0 0.0
    %979 = vmatpush1.msra.mxu0 0.0
    %980 = vmatprep.subr.mxu0 0.0
    %981 = vmatpush1.msra.mxu0 0.0
    %982 = vmatprep.subr.mxu0 0.0
    %983 = vmatpush1.msra.mxu0 0.0
    %984 = vmatprep.subr.mxu0 0.0
    %985 = vmatpush1.msra.mxu0 0.0
    %986 = vmatprep.subr.mxu0 0.0
    %987 = vmatpush1.msra.mxu0 0.0
    %988 = vmatprep.subr.mxu0 0.0
    %989 = vmatpush1.msra.mxu0 0.0
    %990 = vmatprep.mubr.f32.mxu0 0.0
    %991 = vmatmul.mubr.f32.gmra.mrb[0].mxu0 %v924
    %v992 = vpop.f32.mrb[0].mxu0
    %v993 = vadd.f32 %v920, %v992
    %v994 = vpop.f32.mrb[0].mxu0
    %995 = vdwg.mxu0
    %vm996 = vcmask 58368
    %997 = vst.msk [vmem:[#allocation3] sm:$0x3] %vm996, %v993
    // Predicated region
    $region18: #{lstm_model_forward.1} parent=1 // pred_check
      _
    $region19: #{lstm_model_forward.1} parent=1 // pred_check_branch
      %999 = sbr.rel (0) target = $region21
    $region20: #{lstm_model_forward.1} parent=1 // pred_region
      %s1001 = ssub.s32 32, 32
      %1002 = vsyncadd [#allocation4], %s1001
      %s1004 = sshll.u32 [#allocation3], 4
      %s1005 = int_to_ptr.vmem [resolvable:$true] %s1004
      %1007 = dma.vmem_to_hbm [thread:$0]  %s1005, 32, %s4, [#allocation4]
    $region21: #{lstm_model_forward.1} parent=1 // pred_fallthru
      _
    // Predicated region
    $region22: #{lstm_model_forward.1} parent=1 // pred_check
      _
    $region23: #{lstm_model_forward.1} parent=1 // pred_check_branch
      %1009 = sbr.rel (0) target = $region25
    $region24: #{lstm_model_forward.1} parent=1 // pred_region
      %1010 = dma.done [#allocation4], 32
    $region25: #{lstm_model_forward.1} parent=1 // pred_fallthru
      _
    %1011 = vsyncpa [#allocation4], 1

</llo_original>
